<compile_context>
chip_gen: v6e
topology: v6e:2x2x1
jax: 0.10.0
libtpu: 0.0.40
codegen_flags: <defaults>
</compile_context>

<pallas_src>
import jax
import jax.numpy as jnp
from jax.experimental import pallas as pl
from jax.experimental.pallas import tpu as pltpu


# --------------------------- Pallas kernels -------------------------------- #

def _dcu_up_fused_kernel(x_ref, pre_ref,
                         wp_ref, sp_ref, bp_ref,
                         wfp_ref, wfc_ref, sf_ref, bf_ref,
                         cur_ref, y_ref):
    """Fused conv_proj+BN+ReLU and conv_fusion+BN+ReLU over one spatial tile.

    x_ref   : (Cin,  T)   channel-major activation tile
    pre_ref : (Cpre, T)   pre_x tile (native NCHW layout)
    wp_ref  : (Cout, Cin) conv_proj weight
    wfp_ref : (Cout, Cpre), wfc_ref : (Cout, Cout) split conv_fusion weight
    sp/bp, sf/bf : (Cout, 1) folded BatchNorm scale / shift (f32)
    cur_ref, y_ref : (Cout, T) outputs, T is a multiple of 128 (lane-dense)
    """
    # conv_proj (1x1) -> folded BN -> ReLU, accumulated in f32.
    cur = jnp.dot(wp_ref[...], x_ref[...], preferred_element_type=jnp.float32)
    cur = jnp.maximum(cur * sp_ref[...] + bp_ref[...], 0.0)
    cur_ref[...] = cur.astype(cur_ref.dtype)

    # cat((pre_x, cur), channel) followed by conv_fusion == two matmuls summed.
    acc = jnp.dot(wfp_ref[...], pre_ref[...], preferred_element_type=jnp.float32)
    acc = acc + jnp.dot(wfc_ref[...], cur.astype(wfc_ref.dtype),
                        preferred_element_type=jnp.float32)
    y = jnp.maximum(acc * sf_ref[...] + bf_ref[...], 0.0)
    y_ref[...] = y.astype(y_ref.dtype)


def _dcu_up_proj_kernel(x_ref, wp_ref, sp_ref, bp_ref, cur_ref):
    """pre_outplanes == 0 path: conv_proj + folded BN + ReLU only."""
    cur = jnp.dot(wp_ref[...], x_ref[...], preferred_element_type=jnp.float32)
    cur = jnp.maximum(cur * sp_ref[...] + bp_ref[...], 0.0)
    cur_ref[...] = cur.astype(cur_ref.dtype)


# ------------------------------ tiling helpers ------------------------------ #

def _round_up(n, m):
    return ((n + m - 1) // m) * m


def _choose_tile(hw, t_target):
    """Spatial (lane) tile: multiple of 128, capped at t_target."""
    if hw >= t_target:
        return t_target
    return _round_up(hw, 128)


def _nearest_upsample(x_nchw, s):
    """F.interpolate(..., size=(H*s, W*s)), default mode='nearest'."""
    # TODO(synk): the nearest-neighbor scatter is not a rectangular block map,
    # so it cannot be fused into the kernel's output BlockSpec; it is done as
    # a broadcast+reshape in the wrapper (pure data movement handled by XLA).
    if s == 1:
        return x_nchw
    B, C, H, W = x_nchw.shape
    return jnp.broadcast_to(
        x_nchw[:, :, :, None, :, None], (B, C, H, s, W, s)
    ).reshape(B, C, H * s, W * s)


# --------------------------- parameter setup ------------------------------- #

def _fold_bn(bias, gamma, beta, mean, var, eps):
    scale = gamma / jnp.sqrt(var + eps)
    shift = beta + (bias - mean) * scale
    # (Cout, 1): broadcasts over the lane (spatial) axis in the kernel.
    return scale.reshape(-1, 1), shift.reshape(-1, 1)


def init_dcu_up_params(key, inplanes, outplanes, pre_outplanes, eps=1e-6):
    ks = jax.random.split(key, 12)
    p = {}
    # conv_proj 1x1 weight, stored conv-native as (Cout, Cin).
    w_proj = 0.05 * jax.random.normal(ks[0], (outplanes, inplanes), jnp.float32)
    b_proj = 0.05 * jax.random.normal(ks[1], (outplanes,), jnp.float32)
    g_p = 1.0 + 0.1 * jax.random.normal(ks[2], (outplanes,), jnp.float32)
    be_p = 0.1 * jax.random.normal(ks[3], (outplanes,), jnp.float32)
    mu_p = 0.1 * jax.random.normal(ks[4], (outplanes,), jnp.float32)
    va_p = jnp.abs(1.0 + 0.1 * jax.random.normal(ks[5], (outplanes,), jnp.float32))
    p["w_proj"] = w_proj
    p["scale_proj"], p["shift_proj"] = _fold_bn(b_proj, g_p, be_p, mu_p, va_p, eps)

    if pre_outplanes != 0:
        cpre = pre_outplanes - outplanes  # channels contributed by pre_x
        assert cpre > 0
        # conv_fusion weight (Cout, pre_outplanes), split along the concat axis:
        # first cpre input channels act on pre_x, last outplanes on cur_x.
        w_fus = 0.05 * jax.random.normal(ks[6], (outplanes, pre_outplanes), jnp.float32)
        b_fus = 0.05 * jax.random.normal(ks[7], (outplanes,), jnp.float32)
        g_f = 1.0 + 0.1 * jax.random.normal(ks[8], (outplanes,), jnp.float32)
        be_f = 0.1 * jax.random.normal(ks[9], (outplanes,), jnp.float32)
        mu_f = 0.1 * jax.random.normal(ks[10], (outplanes,), jnp.float32)
        va_f = jnp.abs(1.0 + 0.1 * jax.random.normal(ks[11], (outplanes,), jnp.float32))
        p["w_fus_pre"] = w_fus[:, :cpre]
        p["w_fus_cur"] = w_fus[:, cpre:]
        p["scale_fus"], p["shift_fus"] = _fold_bn(b_fus, g_f, be_f, mu_f, va_f, eps)
    return p


# ------------------------------ forward ------------------------------------ #

def dcu_up_forward(params, x, pre_x, H, W, up_stride, pre_outplanes,
                   act_dtype=jnp.float32, t_target=1024):
    """x: (B, 1+H*W, C) tokens; pre_x: (B, Cpre, H, W) NCHW (or None).
    Returns (upsampled NCHW, cur_x NCHW) matching the PyTorch module."""
    B, _, Cin = x.shape
    HW = H * W
    Cout = params["w_proj"].shape[0]

    # x[:, 1:].transpose(1, 2) of the module == channel-major (B, Cin, HW).
    x_cm = jnp.transpose(x[:, 1:, :], (0, 2, 1)).astype(act_dtype)

    # Spatial tile (lane axis): multiple of 128, pad HW up to a multiple of it
    # so the pipeline never degenerates to one whole-array block.
    t = _choose_tile(HW, t_target)
    HWp = _round_up(HW, t)
    if HWp != HW:
        x_cm = jnp.pad(x_cm, ((0, 0), (0, 0), (0, HWp - HW)))

    grid = (B, HWp // t)
    cparams = pltpu.CompilerParams(dimension_semantics=("parallel", "parallel"))

    def row_spec(c):
        # (batch squeezed, channels on sublanes, spatial tile on lanes)
        return pl.BlockSpec((None, c, t), lambda b, i: (b, 0, i))

    def const_spec(shape):
        # grid-invariant blocks (weights, folded BN scale/shift)
        return pl.BlockSpec(shape, lambda b, i: (0, 0))

    if pre_outplanes != 0:
        Cpre = pre_x.shape[1]
        # pre_x is already channel-major NCHW: reshape only, zero relayout.
        pre_cm = pre_x.reshape(B, Cpre, HW).astype(act_dtype)
        if HWp != HW:
            pre_cm = jnp.pad(pre_cm, ((0, 0), (0, 0), (0, HWp - HW)))

        cur_p, y_p = pl.pallas_call(
            _dcu_up_fused_kernel,
            out_shape=(jax.ShapeDtypeStruct((B, Cout, HWp), act_dtype),
                       jax.ShapeDtypeStruct((B, Cout, HWp), act_dtype)),
            grid=grid,
            in_specs=[
                row_spec(Cin),
                row_spec(Cpre),
                const_spec((Cout, Cin)),
                const_spec((Cout, 1)),
                const_spec((Cout, 1)),
                const_spec((Cout, Cpre)),
                const_spec((Cout, Cout)),
                const_spec((Cout, 1)),
                const_spec((Cout, 1)),
            ],
            out_specs=(row_spec(Cout), row_spec(Cout)),
            compiler_params=cparams,
        )(x_cm, pre_cm,
          params["w_proj"].astype(act_dtype),
          params["scale_proj"], params["shift_proj"],
          params["w_fus_pre"].astype(act_dtype),
          params["w_fus_cur"].astype(act_dtype),
          params["scale_fus"], params["shift_fus"])
    else:
        cur_p = pl.pallas_call(
            _dcu_up_proj_kernel,
            out_shape=jax.ShapeDtypeStruct((B, Cout, HWp), act_dtype),
            grid=grid,
            in_specs=[
                row_spec(Cin),
                const_spec((Cout, Cin)),
                const_spec((Cout, 1)),
                const_spec((Cout, 1)),
            ],
            out_specs=row_spec(Cout),
            compiler_params=cparams,
        )(x_cm, params["w_proj"].astype(act_dtype),
          params["scale_proj"], params["shift_proj"])
        y_p = cur_p

    # Drop spatial padding; outputs are already NCHW-flat -> reshape is free.
    cur = cur_p[:, :, :HW].reshape(B, Cout, H, W)
    y = y_p[:, :, :HW].reshape(B, Cout, H, W)
    up = _nearest_upsample(y, up_stride)
    return up, cur


# ----------------------- pure-JAX reference (check) ------------------------- #

def _ref_forward(params, x, pre_x, H, W, up_stride, pre_outplanes):
    B, _, C = x.shape
    xr = jnp.transpose(x[:, 1:, :].astype(jnp.float32), (0, 2, 1)).reshape(B, C, H, W)

    def bn_relu(z, scale, shift):
        return jnp.maximum(z * scale.reshape(1, -1, 1, 1)
                           + shift.reshape(1, -1, 1, 1), 0.0)

    cur = bn_relu(jnp.einsum('oc,bchw->bohw',
                             params["w_proj"].astype(jnp.float32), xr),
                  params["scale_proj"], params["shift_proj"])
    y = cur
    if pre_outplanes != 0:
        z = (jnp.einsum('oc,bchw->bohw',
                        params["w_fus_pre"].astype(jnp.float32),
                        pre_x.astype(jnp.float32))
             + jnp.einsum('oc,bchw->bohw',
                          params["w_fus_cur"].astype(jnp.float32), cur))
        y = bn_relu(z, params["scale_fus"], params["shift_fus"])
    up = _nearest_upsample(y, up_stride)
    return up, cur


# --------------------------------- main ------------------------------------ #

if __name__ == "__main__":
    B, H, W = 2, 8, 8
    inplanes, outplanes, pre_outplanes, up_stride = 32, 16, 24, 2
    Cpre = pre_outplanes - outplanes

    key = jax.random.PRNGKey(0)
    k_params, k_x, k_pre = jax.random.split(key, 3)

    params = init_dcu_up_params(k_params, inplanes, outplanes, pre_outplanes)
    x = jax.random.normal(k_x, (B, 1 + H * W, inplanes), jnp.float32)
    pre_x = jax.random.normal(k_pre, (B, Cpre, H, W), jnp.float32)

    # f32 path (tight check against pure-JAX reference).
    up_out, cur_out = dcu_up_forward(params, x, pre_x, H, W, up_stride,
                                     pre_outplanes)
    jax.block_until_ready((up_out, cur_out))
    ref_up, ref_cur = _ref_forward(params, x, pre_x, H, W, up_stride,
                                   pre_outplanes)
    assert up_out.shape == (B, outplanes, H * up_stride, W * up_stride)
    assert cur_out.shape == (B, outplanes, H, W)
    assert float(jnp.max(jnp.abs(up_out - ref_up))) < 1e-4
    assert float(jnp.max(jnp.abs(cur_out - ref_cur))) < 1e-4

    # bf16 storage path (HBM-bandwidth win on v6e/v7x): f32 accumulate +
    # f32 BN/ReLU epilogue, cast on store; loose tolerance.
    up_bf, cur_bf = dcu_up_forward(params, x, pre_x, H, W, up_stride,
                                   pre_outplanes, act_dtype=jnp.bfloat16)
    jax.block_until_ready((up_bf, cur_bf))
    assert float(jnp.max(jnp.abs(up_bf.astype(jnp.float32) - ref_up))) < 5e-2
    assert float(jnp.max(jnp.abs(cur_bf.astype(jnp.float32) - ref_cur))) < 5e-2

    # pre_outplanes == 0 branch (proj-only kernel).
    params0 = init_dcu_up_params(k_params, inplanes, outplanes, 0)
    up0, cur0 = dcu_up_forward(params0, x, None, H, W, up_stride, 0)
    jax.block_until_ready((up0, cur0))
    ref_up0, ref_cur0 = _ref_forward(params0, x, None, H, W, up_stride, 0)
    assert float(jnp.max(jnp.abs(up0 - ref_up0))) < 1e-4
    assert float(jnp.max(jnp.abs(cur0 - ref_cur0))) < 1e-4

    print("KERNEL_OK")
</pallas_src>

<mosaic_0001>
module attributes {stable_mosaic.version = 11 : i64} {
  func.func @_dcu_up_fused_kernel(%arg0: i32, %arg1: i32, %arg2: memref<1x32x128xf32, #tpu.memory_space<vmem>>, %arg3: memref<1x8x128xf32, #tpu.memory_space<vmem>>, %arg4: memref<16x32xf32, #tpu.memory_space<vmem>>, %arg5: memref<16x1xf32, #tpu.memory_space<vmem>>, %arg6: memref<16x1xf32, #tpu.memory_space<vmem>>, %arg7: memref<16x8xf32, #tpu.memory_space<vmem>>, %arg8: memref<16x16xf32, #tpu.memory_space<vmem>>, %arg9: memref<16x1xf32, #tpu.memory_space<vmem>>, %arg10: memref<16x1xf32, #tpu.memory_space<vmem>>, %arg11: memref<1x16x128xf32, #tpu.memory_space<vmem>>, %arg12: memref<1x16x128xf32, #tpu.memory_space<vmem>>) attributes {dimension_semantics = [#tpu.dimension_semantics<parallel>, #tpu.dimension_semantics<parallel>], iteration_bounds = array<i64: 2, 1>, scalar_prefetch = 0 : i64, scratch_operands = 0 : i64, tpu.core_type = #tpu.core_type<tc>, window_params = [{transform_indices = @transform_0, window_bounds = array<i64: 1, 32, 128>}, {transform_indices = @transform_1, window_bounds = array<i64: 1, 8, 128>}, {pipeline_mode = #tpu.pipeline_mode<synchronous>, transform_indices = @transform_2, window_bounds = array<i64: 16, 32>}, {pipeline_mode = #tpu.pipeline_mode<synchronous>, transform_indices = @transform_3, window_bounds = array<i64: 16, 1>}, {pipeline_mode = #tpu.pipeline_mode<synchronous>, transform_indices = @transform_4, window_bounds = array<i64: 16, 1>}, {pipeline_mode = #tpu.pipeline_mode<synchronous>, transform_indices = @transform_5, window_bounds = array<i64: 16, 8>}, {pipeline_mode = #tpu.pipeline_mode<synchronous>, transform_indices = @transform_6, window_bounds = array<i64: 16, 16>}, {pipeline_mode = #tpu.pipeline_mode<synchronous>, transform_indices = @transform_7, window_bounds = array<i64: 16, 1>}, {pipeline_mode = #tpu.pipeline_mode<synchronous>, transform_indices = @transform_8, window_bounds = array<i64: 16, 1>}, {transform_indices = @transform_9, window_bounds = array<i64: 1, 16, 128>}, {transform_indices = @transform_10, window_bounds = array<i64: 1, 16, 128>}]} {
    %c0 = arith.constant 0 : index
    %c0_0 = arith.constant 0 : index
    %0 = vector.load %arg4[%c0, %c0_0] : memref<16x32xf32, #tpu.memory_space<vmem>>, vector<16x32xf32>
    %c0_1 = arith.constant 0 : index
    %c0_2 = arith.constant 0 : index
    %c0_3 = arith.constant 0 : index
    %1 = vector.load %arg2[%c0_1, %c0_2, %c0_3] : memref<1x32x128xf32, #tpu.memory_space<vmem>>, vector<1x32x128xf32>
    %2 = vector.shape_cast %1 : vector<1x32x128xf32> to vector<32x128xf32>
    %cst = arith.constant dense<0.000000e+00> : vector<16x128xf32>
    %3 = tpu.matmul %0, %2, %cst {dimension_numbers = #tpu.dot_dimension_numbers<[1], [0], [0], [1], [0, 0, 1, 1], [], []>} : vector<16x32xf32>, vector<32x128xf32>, vector<16x128xf32> -> vector<16x128xf32>
    %c0_4 = arith.constant 0 : index
    %c0_5 = arith.constant 0 : index
    %4 = vector.load %arg5[%c0_4, %c0_5] : memref<16x1xf32, #tpu.memory_space<vmem>>, vector<16x1xf32>
    %5 = vector.broadcast %4 : vector<16x1xf32> to vector<16x128xf32>
    %6 = arith.mulf %3, %5 : vector<16x128xf32>
    %c0_6 = arith.constant 0 : index
    %c0_7 = arith.constant 0 : index
    %7 = vector.load %arg6[%c0_6, %c0_7] : memref<16x1xf32, #tpu.memory_space<vmem>>, vector<16x1xf32>
    %8 = vector.broadcast %7 : vector<16x1xf32> to vector<16x128xf32>
    %9 = arith.addf %6, %8 : vector<16x128xf32>
    %cst_8 = arith.constant 0.000000e+00 : f32
    %10 = vector.broadcast %cst_8 : f32 to vector<16x128xf32>
    %11 = arith.maximumf %9, %10 : vector<16x128xf32>
    %c0_9 = arith.constant 0 : index
    %c0_10 = arith.constant 0 : index
    %c0_11 = arith.constant 0 : index
    %12 = vector.load %arg11[%c0_9, %c0_10, %c0_11] : memref<1x16x128xf32, #tpu.memory_space<vmem>>, vector<1x16x128xf32>
    %13 = vector.shape_cast %12 : vector<1x16x128xf32> to vector<16x128xf32>
    %14 = vector.shape_cast %11 : vector<16x128xf32> to vector<1x16x128xf32>
    tpu.vector_store %arg11[%c0_9, %c0_10, %c0_11], %14 {strides = array<i32>} : memref<1x16x128xf32, #tpu.memory_space<vmem>>, vector<1x16x128xf32>,
    %c0_12 = arith.constant 0 : index
    %c0_13 = arith.constant 0 : index
    %15 = vector.load %arg7[%c0_12, %c0_13] : memref<16x8xf32, #tpu.memory_space<vmem>>, vector<16x8xf32>
    %c0_14 = arith.constant 0 : index
    %c0_15 = arith.constant 0 : index
    %c0_16 = arith.constant 0 : index
    %16 = vector.load %arg3[%c0_14, %c0_15, %c0_16] : memref<1x8x128xf32, #tpu.memory_space<vmem>>, vector<1x8x128xf32>
    %17 = vector.shape_cast %16 : vector<1x8x128xf32> to vector<8x128xf32>
    %cst_17 = arith.constant dense<0.000000e+00> : vector<16x128xf32>
    %18 = tpu.matmul %15, %17, %cst_17 {dimension_numbers = #tpu.dot_dimension_numbers<[1], [0], [0], [1], [0, 0, 1, 1], [], []>} : vector<16x8xf32>, vector<8x128xf32>, vector<16x128xf32> -> vector<16x128xf32>
    %c0_18 = arith.constant 0 : index
    %c0_19 = arith.constant 0 : index
    %19 = vector.load %arg8[%c0_18, %c0_19] : memref<16x16xf32, #tpu.memory_space<vmem>>, vector<16x16xf32>
    %cst_20 = arith.constant dense<0.000000e+00> : vector<16x128xf32>
    %20 = tpu.matmul %19, %11, %cst_20 {dimension_numbers = #tpu.dot_dimension_numbers<[1], [0], [0], [1], [0, 0, 1, 1], [], []>} : vector<16x16xf32>, vector<16x128xf32>, vector<16x128xf32> -> vector<16x128xf32>
    %21 = arith.addf %18, %20 : vector<16x128xf32>
    %c0_21 = arith.constant 0 : index
    %c0_22 = arith.constant 0 : index
    %22 = vector.load %arg9[%c0_21, %c0_22] : memref<16x1xf32, #tpu.memory_space<vmem>>, vector<16x1xf32>
    %23 = vector.broadcast %22 : vector<16x1xf32> to vector<16x128xf32>
    %24 = arith.mulf %21, %23 : vector<16x128xf32>
    %c0_23 = arith.constant 0 : index
    %c0_24 = arith.constant 0 : index
    %25 = vector.load %arg10[%c0_23, %c0_24] : memref<16x1xf32, #tpu.memory_space<vmem>>, vector<16x1xf32>
    %26 = vector.broadcast %25 : vector<16x1xf32> to vector<16x128xf32>
    %27 = arith.addf %24, %26 : vector<16x128xf32>
    %cst_25 = arith.constant 0.000000e+00 : f32
    %28 = vector.broadcast %cst_25 : f32 to vector<16x128xf32>
    %29 = arith.maximumf %27, %28 : vector<16x128xf32>
    %c0_26 = arith.constant 0 : index
    %c0_27 = arith.constant 0 : index
    %c0_28 = arith.constant 0 : index
    %30 = vector.load %arg12[%c0_26, %c0_27, %c0_28] : memref<1x16x128xf32, #tpu.memory_space<vmem>>, vector<1x16x128xf32>
    %31 = vector.shape_cast %30 : vector<1x16x128xf32> to vector<16x128xf32>
    %32 = vector.shape_cast %29 : vector<16x128xf32> to vector<1x16x128xf32>
    tpu.vector_store %arg12[%c0_26, %c0_27, %c0_28], %32 {strides = array<i32>} : memref<1x16x128xf32, #tpu.memory_space<vmem>>, vector<1x16x128xf32>,
    return
  }
  func.func @transform_0(%arg0: i32, %arg1: i32) -> (i32, i32, i32) {
    %c0_i32 = arith.constant 0 : i32
    %c0_i32_0 = arith.constant 0 : i32
    return %arg0, %c0_i32, %arg1 : i32, i32, i32
  }
  func.func @transform_1(%arg0: i32, %arg1: i32) -> (i32, i32, i32) {
    %c0_i32 = arith.constant 0 : i32
    %c0_i32_0 = arith.constant 0 : i32
    return %arg0, %c0_i32, %arg1 : i32, i32, i32
  }
  func.func @transform_2(%arg0: i32, %arg1: i32) -> (i32, i32) {
    %c0_i32 = arith.constant 0 : i32
    %c0_i32_0 = arith.constant 0 : i32
    %c0_i32_1 = arith.constant 0 : i32
    return %c0_i32, %c0_i32_0 : i32, i32
  }
  func.func @transform_3(%arg0: i32, %arg1: i32) -> (i32, i32) {
    %c0_i32 = arith.constant 0 : i32
    %c0_i32_0 = arith.constant 0 : i32
    %c0_i32_1 = arith.constant 0 : i32
    return %c0_i32, %c0_i32_0 : i32, i32
  }
  func.func @transform_4(%arg0: i32, %arg1: i32) -> (i32, i32) {
    %c0_i32 = arith.constant 0 : i32
    %c0_i32_0 = arith.constant 0 : i32
    %c0_i32_1 = arith.constant 0 : i32
    return %c0_i32, %c0_i32_0 : i32, i32
  }
  func.func @transform_5(%arg0: i32, %arg1: i32) -> (i32, i32) {
    %c0_i32 = arith.constant 0 : i32
    %c0_i32_0 = arith.constant 0 : i32
    %c0_i32_1 = arith.constant 0 : i32
    return %c0_i32, %c0_i32_0 : i32, i32
  }
  func.func @transform_6(%arg0: i32, %arg1: i32) -> (i32, i32) {
    %c0_i32 = arith.constant 0 : i32
    %c0_i32_0 = arith.constant 0 : i32
    %c0_i32_1 = arith.constant 0 : i32
    return %c0_i32, %c0_i32_0 : i32, i32
  }
  func.func @transform_7(%arg0: i32, %arg1: i32) -> (i32, i32) {
    %c0_i32 = arith.constant 0 : i32
    %c0_i32_0 = arith.constant 0 : i32
    %c0_i32_1 = arith.constant 0 : i32
    return %c0_i32, %c0_i32_0 : i32, i32
  }
  func.func @transform_8(%arg0: i32, %arg1: i32) -> (i32, i32) {
    %c0_i32 = arith.constant 0 : i32
    %c0_i32_0 = arith.constant 0 : i32
    %c0_i32_1 = arith.constant 0 : i32
    return %c0_i32, %c0_i32_0 : i32, i32
  }
  func.func @transform_9(%arg0: i32, %arg1: i32) -> (i32, i32, i32) {
    %c0_i32 = arith.constant 0 : i32
    %c0_i32_0 = arith.constant 0 : i32
    return %arg0, %c0_i32, %arg1 : i32, i32, i32
  }
  func.func @transform_10(%arg0: i32, %arg1: i32) -> (i32, i32, i32) {
    %c0_i32 = arith.constant 0 : i32
    %c0_i32_0 = arith.constant 0 : i32
    return %arg0, %c0_i32, %arg1 : i32, i32, i32
  }
}

</mosaic_0001>

<llo_original>
// kernel: tpu_custom_call.1
$region0: #{tpu_custom_call.1}
  #allocation0 [shape = 'u32[]', space=smem, size = 0x4, offset = 0x4, fixed_abs, tag = 'smem constant byte address 0x4 - core index']
  #allocation1 [shape = 'u32[144,128]{1,0:T(1,128)}', space=vmem, size = 0x12000, scoped, tag = 'internal scratch']
  %s0 = inlined_call_operand.vmem [shape: f32[2,32,128], index: 0, kind: input, shape index: {}]
  %s1 = inlined_call_operand.vmem [shape: f32[2,8,128], index: 1, kind: input, shape index: {}]
  %s2 = inlined_call_operand.hbm [shape: f32[16,32], index: 2, kind: input, shape index: {}]
  %s3 = inlined_call_operand.vmem [shape: f32[16,1], index: 3, kind: input, shape index: {}]
  %s4 = inlined_call_operand.vmem [shape: f32[16,1], index: 4, kind: input, shape index: {}]
  %s5 = inlined_call_operand.vmem [shape: f32[16,8], index: 5, kind: input, shape index: {}]
  %s6 = inlined_call_operand.vmem [shape: f32[16,16], index: 6, kind: input, shape index: {}]
  %s7 = inlined_call_operand.vmem [shape: f32[16,1], index: 7, kind: input, shape index: {}]
  %s8 = inlined_call_operand.vmem [shape: f32[16,1], index: 8, kind: input, shape index: {}]
  %s9 = inlined_call_operand.hbm [shape: f32[2,16,128], index: 9, kind: output, shape index: {0}]
  %s10 = inlined_call_operand.hbm [shape: f32[2,16,128], index: 10, kind: output, shape index: {1}]
  %11 = xla_tuple %s9, %s10
  %s12 = sld [smem:[#allocation0]]
  $region81: #{tpu_custom_call.1} parent=0
    _
  %s14 = ssub.s32 1, %s12
  %s15 = scalar_select 0, %s14, %s12
  $region1: #{tpu_custom_call.1} parent=0
    #allocation2 [shape = 'u8[8192]{0}', space=vmem, size = 0x2000, scoped, tag = 'input window, operand 2, single buffered']
    #allocation3 [shape = 's32[2]{0}', space=sflag, size = 0x8, scoped, tag = 'scoped memory for tpu_custom_call.1']
    #allocation4 [shape = 's32[2]{0}', space=sflag, size = 0x8, scoped, tag = 'scoped memory for tpu_custom_call.1']
    #allocation5 [shape = 'u8[16384]{0}', space=vmem, size = 0x4000, scoped, tag = 'output window, operand 0']
    #allocation6 [shape = 'u8[16384]{0}', space=vmem, size = 0x4000, scoped, tag = 'output window, operand 1']
    #allocation7 [shape = 's32[2]{0}', space=sflag, size = 0x8, scoped, tag = 'scoped memory for tpu_custom_call.1']
    %16 = vsyncpa [#allocation3], 0
    %17 = vsyncpa [#allocation4], 0
    %s18 = scalar_lea.sflag [#allocation4], 1
    %19 = vsyncpa %s18, 0
    %20 = vsyncpa [#allocation7], 0
    %s21 = scalar_lea.sflag [#allocation7], 1
    %22 = vsyncpa %s21, 0
    loop: start=0, step=1, limit=4
    $region2: #{tpu_custom_call.1} parent=1 // loop_pre_header
      _
    $region3: #{tpu_custom_call.1} parent=1 // loop_header
      %s24 = sphi 0, %s28
      %p25 = scmp.ge.s32.totalorder %s24, 4
      %s31 = sphi 0, %s43
      %s32 = sphi 0, %s39
      %s33 = sphi 0, %s31
      %s34 = sphi 0, %s32
      %s35 = sphi 0, %s33
      %s36 = sphi 0, %s34
      %s48 = sphi 0, %s50
      %s51 = sphi 0, %s48
      %s52 = sphi 0, %s51
      %s68 = sphi 0, %s52
      %s76 = sphi 0, %s78
      %s79 = sphi 0, %s76
      %s80 = sphi 0, %s79
      %s96 = sphi 0, %s80
      %s100 = sphi 0, %s100
      %s102 = sphi 0, %s100
      %s103 = sphi 0, %s102
      %s117 = sphi 0, %s103
      %s121 = sphi 0, %s121
      %s123 = sphi 0, %s121
      %s124 = sphi 0, %s123
      %s138 = sphi 0, %s124
      %s142 = sphi 0, %s142
      %s144 = sphi 0, %s142
      %s145 = sphi 0, %s144
      %s159 = sphi 0, %s145
      %s163 = sphi 0, %s163
      %s165 = sphi 0, %s163
      %s166 = sphi 0, %s165
      %s180 = sphi 0, %s166
      %s184 = sphi 0, %s184
      %s186 = sphi 0, %s184
      %s187 = sphi 0, %s186
      %s201 = sphi 0, %s187
      %s205 = sphi 0, %s205
      %s207 = sphi 0, %s205
      %s208 = sphi 0, %s207
      %s222 = sphi 0, %s208
      %s226 = sphi 0, %s226
      %s228 = sphi 0, %s226
      %s229 = sphi 0, %s228
      %s243 = sphi 0, %s229
      %s251 = sphi 0, %s253
      %s254 = sphi 0, %s251
      %s255 = sphi 0, %s254
      %s271 = sphi 0, %s255
      %s279 = sphi 0, %s281
      %s282 = sphi 0, %s279
      %s283 = sphi 0, %s282
      %s299 = sphi 0, %s283
    $region4: #{tpu_custom_call.1} parent=1 // loop_header_branch
      %27 = sbr.rel (%p25) target = $region8
    $region5: #{tpu_custom_call.1} parent=1 // loop_body
      %s29 = ssub.s32 %s24, 1
      %s30 = ssub.s32 %s24, 2
      %s37 = sadd.s32 1, %s32
      %p38 = scmp.ge.s32.totalorder %s37, 1
      %s39 = scalar_select %p38, 0, %s37
      %s40 = sadd.s32 1, %s31
      %s41 = scalar_select %p38, %s40, %s31
      %p42 = scmp.ge.s32.totalorder %s41, 2
      %s43 = scalar_select %p42, 0, %s41
      %s44 = ssub.s32 %s31, %s43
      %s45 = ssub.s32 %s32, %s39
      %s46 = sor.u32 %s44, %s45
      %p47 = scmp.eq.s32.totalorder %s46, 0
      %s49 = sadd.s32 %s48, 1
      %s50 = scalar_select %p47, %s48, %s49
      %p53 = pneg %p47
      %p54 = scmp.eq.s32.totalorder %s24, 1
      %p55 = por %p53, %p54
      %p56 = scmp.ne.s32.totalorder %s48, %s51
      %p57 = scmp.eq.s32.totalorder %s24, 0
      %p58 = por %p56, %p57
      %p59 = scmp.ne.s32.totalorder %s48, %s51
      %p60 = scmp.eq.s32.totalorder %s29, 1
      %p61 = por %p59, %p60
      %p62 = scmp.ne.s32.totalorder %s51, %s52
      %p63 = scmp.eq.s32.totalorder %s29, 0
      %p64 = por %p62, %p63
      %p65 = scmp.ne.s32.totalorder %s51, %s52
      %p66 = scmp.eq.s32.totalorder %s30, 1
      %p67 = por %p65, %p66
      %p69 = scmp.ne.s32.totalorder %s52, %s68
      %p70 = scmp.eq.s32.totalorder %s30, 0
      %p71 = por %p69, %p70
      %s72 = ssub.s32 %s31, %s43
      %s73 = ssub.s32 %s32, %s39
      %s74 = sor.u32 %s72, %s73
      %p75 = scmp.eq.s32.totalorder %s74, 0
      %s77 = sadd.s32 %s76, 1
      %s78 = scalar_select %p75, %s76, %s77
      %p81 = pneg %p75
      %p82 = scmp.eq.s32.totalorder %s24, 1
      %p83 = por %p81, %p82
      %p84 = scmp.ne.s32.totalorder %s76, %s79
      %p85 = scmp.eq.s32.totalorder %s24, 0
      %p86 = por %p84, %p85
      %p87 = scmp.ne.s32.totalorder %s76, %s79
      %p88 = scmp.eq.s32.totalorder %s29, 1
      %p89 = por %p87, %p88
      %p90 = scmp.ne.s32.totalorder %s79, %s80
      %p91 = scmp.eq.s32.totalorder %s29, 0
      %p92 = por %p90, %p91
      %p93 = scmp.ne.s32.totalorder %s79, %s80
      %p94 = scmp.eq.s32.totalorder %s30, 1
      %p95 = por %p93, %p94
      %p97 = scmp.ne.s32.totalorder %s80, %s96
      %p98 = scmp.eq.s32.totalorder %s30, 0
      %p99 = por %p97, %p98
      %s101 = sadd.s32 %s100, 1
      %p104 = scmp.eq.s32.totalorder %s24, 1
      %p105 = scmp.ne.s32.totalorder %s100, %s102
      %p106 = scmp.eq.s32.totalorder %s24, 0
      %p107 = por %p105, %p106
      %p108 = scmp.ne.s32.totalorder %s100, %s102
      %p109 = scmp.eq.s32.totalorder %s29, 1
      %p110 = por %p108, %p109
      %p111 = scmp.ne.s32.totalorder %s102, %s103
      %p112 = scmp.eq.s32.totalorder %s29, 0
      %p113 = por %p111, %p112
      %p114 = scmp.ne.s32.totalorder %s102, %s103
      %p115 = scmp.eq.s32.totalorder %s30, 1
      %p116 = por %p114, %p115
      %p118 = scmp.ne.s32.totalorder %s103, %s117
      %p119 = scmp.eq.s32.totalorder %s30, 0
      %p120 = por %p118, %p119
      %s122 = sadd.s32 %s121, 1
      %p125 = scmp.eq.s32.totalorder %s24, 1
      %p126 = scmp.ne.s32.totalorder %s121, %s123
      %p127 = scmp.eq.s32.totalorder %s24, 0
      %p128 = por %p126, %p127
      %p129 = scmp.ne.s32.totalorder %s121, %s123
      %p130 = scmp.eq.s32.totalorder %s29, 1
      %p131 = por %p129, %p130
      %p132 = scmp.ne.s32.totalorder %s123, %s124
      %p133 = scmp.eq.s32.totalorder %s29, 0
      %p134 = por %p132, %p133
      %p135 = scmp.ne.s32.totalorder %s123, %s124
      %p136 = scmp.eq.s32.totalorder %s30, 1
      %p137 = por %p135, %p136
      %p139 = scmp.ne.s32.totalorder %s124, %s138
      %p140 = scmp.eq.s32.totalorder %s30, 0
      %p141 = por %p139, %p140
      %s143 = sadd.s32 %s142, 1
      %p146 = scmp.eq.s32.totalorder %s24, 1
      %p147 = scmp.ne.s32.totalorder %s142, %s144
      %p148 = scmp.eq.s32.totalorder %s24, 0
      %p149 = por %p147, %p148
      %p150 = scmp.ne.s32.totalorder %s142, %s144
      %p151 = scmp.eq.s32.totalorder %s29, 1
      %p152 = por %p150, %p151
      %p153 = scmp.ne.s32.totalorder %s144, %s145
      %p154 = scmp.eq.s32.totalorder %s29, 0
      %p155 = por %p153, %p154
      %p156 = scmp.ne.s32.totalorder %s144, %s145
      %p157 = scmp.eq.s32.totalorder %s30, 1
      %p158 = por %p156, %p157
      %p160 = scmp.ne.s32.totalorder %s145, %s159
      %p161 = scmp.eq.s32.totalorder %s30, 0
      %p162 = por %p160, %p161
      %s164 = sadd.s32 %s163, 1
      %p167 = scmp.eq.s32.totalorder %s24, 1
      %p168 = scmp.ne.s32.totalorder %s163, %s165
      %p169 = scmp.eq.s32.totalorder %s24, 0
      %p170 = por %p168, %p169
      %p171 = scmp.ne.s32.totalorder %s163, %s165
      %p172 = scmp.eq.s32.totalorder %s29, 1
      %p173 = por %p171, %p172
      %p174 = scmp.ne.s32.totalorder %s165, %s166
      %p175 = scmp.eq.s32.totalorder %s29, 0
      %p176 = por %p174, %p175
      %p177 = scmp.ne.s32.totalorder %s165, %s166
      %p178 = scmp.eq.s32.totalorder %s30, 1
      %p179 = por %p177, %p178
      %p181 = scmp.ne.s32.totalorder %s166, %s180
      %p182 = scmp.eq.s32.totalorder %s30, 0
      %p183 = por %p181, %p182
      %s185 = sadd.s32 %s184, 1
      %p188 = scmp.eq.s32.totalorder %s24, 1
      %p189 = scmp.ne.s32.totalorder %s184, %s186
      %p190 = scmp.eq.s32.totalorder %s24, 0
      %p191 = por %p189, %p190
      %p192 = scmp.ne.s32.totalorder %s184, %s186
      %p193 = scmp.eq.s32.totalorder %s29, 1
      %p194 = por %p192, %p193
      %p195 = scmp.ne.s32.totalorder %s186, %s187
      %p196 = scmp.eq.s32.totalorder %s29, 0
      %p197 = por %p195, %p196
      %p198 = scmp.ne.s32.totalorder %s186, %s187
      %p199 = scmp.eq.s32.totalorder %s30, 1
      %p200 = por %p198, %p199
      %p202 = scmp.ne.s32.totalorder %s187, %s201
      %p203 = scmp.eq.s32.totalorder %s30, 0
      %p204 = por %p202, %p203
      %s206 = sadd.s32 %s205, 1
      %p209 = scmp.eq.s32.totalorder %s24, 1
      %p210 = scmp.ne.s32.totalorder %s205, %s207
      %p211 = scmp.eq.s32.totalorder %s24, 0
      %p212 = por %p210, %p211
      %p213 = scmp.ne.s32.totalorder %s205, %s207
      %p214 = scmp.eq.s32.totalorder %s29, 1
      %p215 = por %p213, %p214
      %p216 = scmp.ne.s32.totalorder %s207, %s208
      %p217 = scmp.eq.s32.totalorder %s29, 0
      %p218 = por %p216, %p217
      %p219 = scmp.ne.s32.totalorder %s207, %s208
      %p220 = scmp.eq.s32.totalorder %s30, 1
      %p221 = por %p219, %p220
      %p223 = scmp.ne.s32.totalorder %s208, %s222
      %p224 = scmp.eq.s32.totalorder %s30, 0
      %p225 = por %p223, %p224
      %s227 = sadd.s32 %s226, 1
      %p230 = scmp.eq.s32.totalorder %s24, 1
      %p231 = scmp.ne.s32.totalorder %s226, %s228
      %p232 = scmp.eq.s32.totalorder %s24, 0
      %p233 = por %p231, %p232
      %p234 = scmp.ne.s32.totalorder %s226, %s228
      %p235 = scmp.eq.s32.totalorder %s29, 1
      %p236 = por %p234, %p235
      %p237 = scmp.ne.s32.totalorder %s228, %s229
      %p238 = scmp.eq.s32.totalorder %s29, 0
      %p239 = por %p237, %p238
      %p240 = scmp.ne.s32.totalorder %s228, %s229
      %p241 = scmp.eq.s32.totalorder %s30, 1
      %p242 = por %p240, %p241
      %p244 = scmp.ne.s32.totalorder %s229, %s243
      %p245 = scmp.eq.s32.totalorder %s30, 0
      %p246 = por %p244, %p245
      %s247 = ssub.s32 %s31, %s43
      %s248 = ssub.s32 %s32, %s39
      %s249 = sor.u32 %s247, %s248
      %p250 = scmp.eq.s32.totalorder %s249, 0
      %s252 = sadd.s32 %s251, 1
      %s253 = scalar_select %p250, %s251, %s252
      %p256 = pneg %p250
      %p257 = scmp.eq.s32.totalorder %s24, 1
      %p258 = por %p256, %p257
      %p259 = scmp.ne.s32.totalorder %s251, %s254
      %p260 = scmp.eq.s32.totalorder %s24, 0
      %p261 = por %p259, %p260
      %p262 = scmp.ne.s32.totalorder %s251, %s254
      %p263 = scmp.eq.s32.totalorder %s29, 1
      %p264 = por %p262, %p263
      %p265 = scmp.ne.s32.totalorder %s254, %s255
      %p266 = scmp.eq.s32.totalorder %s29, 0
      %p267 = por %p265, %p266
      %p268 = scmp.ne.s32.totalorder %s254, %s255
      %p269 = scmp.eq.s32.totalorder %s30, 1
      %p270 = por %p268, %p269
      %p272 = scmp.ne.s32.totalorder %s255, %s271
      %p273 = scmp.eq.s32.totalorder %s30, 0
      %p274 = por %p272, %p273
      %s275 = ssub.s32 %s31, %s43
      %s276 = ssub.s32 %s32, %s39
      %s277 = sor.u32 %s275, %s276
      %p278 = scmp.eq.s32.totalorder %s277, 0
      %s280 = sadd.s32 %s279, 1
      %s281 = scalar_select %p278, %s279, %s280
      %p284 = pneg %p278
      %p285 = scmp.eq.s32.totalorder %s24, 1
      %p286 = por %p284, %p285
      %p287 = scmp.ne.s32.totalorder %s279, %s282
      %p288 = scmp.eq.s32.totalorder %s24, 0
      %p289 = por %p287, %p288
      %p290 = scmp.ne.s32.totalorder %s279, %s282
      %p291 = scmp.eq.s32.totalorder %s29, 1
      %p292 = por %p290, %p291
      %p293 = scmp.ne.s32.totalorder %s282, %s283
      %p294 = scmp.eq.s32.totalorder %s29, 0
      %p295 = por %p293, %p294
      %p296 = scmp.ne.s32.totalorder %s282, %s283
      %p297 = scmp.eq.s32.totalorder %s30, 1
      %p298 = por %p296, %p297
      %p300 = scmp.ne.s32.totalorder %s283, %s299
      %p301 = scmp.eq.s32.totalorder %s30, 0
      %p302 = por %p300, %p301
      %p303 = scmp.le.s32.totalorder 1, %s24
      %p304 = scmp.lt.s32.totalorder %s24, 3
      %p305 = pnand %p303, %p304
      %p306 = pneg %p305
      // Predicated region
      $region9: #{tpu_custom_call.1} parent=5 // pred_check
        _
      $region10: #{tpu_custom_call.1} parent=5 // pred_check_branch
        %308 = sbr.rel (%p305) target = $region12
      $region11: #{tpu_custom_call.1} parent=5 // pred_region
        %s309 = ssub.s32 %s24, 1
        // Predicated region
        $region13: #{tpu_custom_call.1} parent=11 // pred_check
          %p310 = pneg %p113
        $region14: #{tpu_custom_call.1} parent=11 // pred_check_branch
          %312 = sbr.rel (%p310) target = $region16
        $region15: #{tpu_custom_call.1} parent=11 // pred_region
          %s314 = ssub.s32 256, 256
          %315 = vsyncadd [#allocation3], %s314
          %s316 = sshll.u32 [#allocation2], 4
          %s317 = int_to_ptr.vmem [resolvable:$true] %s316
          %322 = dma.hbm_to_vmem [thread:$0]  %s2, 256, %s317, [#allocation3], 128, 128, 8
        $region16: #{tpu_custom_call.1} parent=11 // pred_fallthru
          _
        // Predicated region
        $region17: #{tpu_custom_call.1} parent=11 // pred_check
          %p323 = pneg %p134
        $region18: #{tpu_custom_call.1} parent=11 // pred_check_branch
          %325 = sbr.rel (%p323) target = $region20
        $region19: #{tpu_custom_call.1} parent=11 // pred_region
          _
        $region20: #{tpu_custom_call.1} parent=11 // pred_fallthru
          _
        // Predicated region
        $region21: #{tpu_custom_call.1} parent=11 // pred_check
          %p326 = pneg %p155
        $region22: #{tpu_custom_call.1} parent=11 // pred_check_branch
          %328 = sbr.rel (%p326) target = $region24
        $region23: #{tpu_custom_call.1} parent=11 // pred_region
          _
        $region24: #{tpu_custom_call.1} parent=11 // pred_fallthru
          _
        // Predicated region
        $region25: #{tpu_custom_call.1} parent=11 // pred_check
          %p329 = pneg %p176
        $region26: #{tpu_custom_call.1} parent=11 // pred_check_branch
          %331 = sbr.rel (%p329) target = $region28
        $region27: #{tpu_custom_call.1} parent=11 // pred_region
          _
        $region28: #{tpu_custom_call.1} parent=11 // pred_fallthru
          _
        // Predicated region
        $region29: #{tpu_custom_call.1} parent=11 // pred_check
          %p332 = pneg %p197
        $region30: #{tpu_custom_call.1} parent=11 // pred_check_branch
          %334 = sbr.rel (%p332) target = $region32
        $region31: #{tpu_custom_call.1} parent=11 // pred_region
          _
        $region32: #{tpu_custom_call.1} parent=11 // pred_fallthru
          _
        // Predicated region
        $region33: #{tpu_custom_call.1} parent=11 // pred_check
          %p335 = pneg %p218
        $region34: #{tpu_custom_call.1} parent=11 // pred_check_branch
          %337 = sbr.rel (%p335) target = $region36
        $region35: #{tpu_custom_call.1} parent=11 // pred_region
          _
        $region36: #{tpu_custom_call.1} parent=11 // pred_fallthru
          _
        // Predicated region
        $region37: #{tpu_custom_call.1} parent=11 // pred_check
          %p338 = pneg %p239
        $region38: #{tpu_custom_call.1} parent=11 // pred_check_branch
          %340 = sbr.rel (%p338) target = $region40
        $region39: #{tpu_custom_call.1} parent=11 // pred_region
          _
        $region40: #{tpu_custom_call.1} parent=11 // pred_fallthru
          _
      $region12: #{tpu_custom_call.1} parent=5 // pred_fallthru
        _
      %p341 = scmp.lt.s32.totalorder %s24, 2
      // Predicated region
      $region41: #{tpu_custom_call.1} parent=5 // pred_check
        %p342 = pneg %p341
      $region42: #{tpu_custom_call.1} parent=5 // pred_check_branch
        %344 = sbr.rel (%p342) target = $region44
      $region43: #{tpu_custom_call.1} parent=5 // pred_region
        // Predicated region
        $region45: #{tpu_custom_call.1} parent=43 // pred_check
          %p345 = pneg %p58
        $region46: #{tpu_custom_call.1} parent=43 // pred_check_branch
          %347 = sbr.rel (%p345) target = $region48
        $region47: #{tpu_custom_call.1} parent=43 // pred_region
          %p348 = scmp.lt.s32.totalorder %s31, 1
          %s349 = scalar_select %p348, %s31, 1
          %p350 = scmp.lt.s32.totalorder %s32, 0
          %s351 = scalar_select %p350, %s32, 0
          %s352 = smul.addr %s349, 4
          %s353 = sadd.s32 %s351, %s352
          %s354 = smul.addr %s353, 8
          %s355 = scalar_lea.vmem %s0, %s354
        $region48: #{tpu_custom_call.1} parent=43 // pred_fallthru
          _
        // Predicated region
        $region49: #{tpu_custom_call.1} parent=43 // pred_check
          %p356 = pneg %p86
        $region50: #{tpu_custom_call.1} parent=43 // pred_check_branch
          %358 = sbr.rel (%p356) target = $region52
        $region51: #{tpu_custom_call.1} parent=43 // pred_region
          %p359 = scmp.lt.s32.totalorder %s31, 1
          %s360 = scalar_select %p359, %s31, 1
          %p361 = scmp.lt.s32.totalorder %s32, 0
          %s362 = scalar_select %p361, %s32, 0
          %s363 = sadd.s32 %s362, %s360
          %s364 = smul.addr %s363, 8
          %s365 = scalar_lea.vmem %s1, %s364
        $region52: #{tpu_custom_call.1} parent=43 // pred_fallthru
          _
      $region44: #{tpu_custom_call.1} parent=5 // pred_fallthru
        _
      %p366 = scmp.le.s32.totalorder 1, %s24
      %p367 = scmp.lt.s32.totalorder %s24, 3
      %p368 = pnand %p366, %p367
      %p369 = pneg %p368
      // Predicated region
      $region53: #{tpu_custom_call.1} parent=5 // pred_check
        _
      $region54: #{tpu_custom_call.1} parent=5 // pred_check_branch
        %371 = sbr.rel (%p368) target = $region56
      $region55: #{tpu_custom_call.1} parent=5 // pred_region
        %s372 = ssub.s32 %s24, 1
        // Predicated region
        $region57: #{tpu_custom_call.1} parent=55 // pred_check
          %p373 = pneg %p113
        $region58: #{tpu_custom_call.1} parent=55 // pred_check_branch
          %375 = sbr.rel (%p373) target = $region60
        $region59: #{tpu_custom_call.1} parent=55 // pred_region
          %376 = dma.done [#allocation3], 256
        $region60: #{tpu_custom_call.1} parent=55 // pred_fallthru
          _
        %p377 = scmp.lt.s32.totalorder %s33, 1
        %s378 = scalar_select %p377, %s33, 1
        %p379 = scmp.lt.s32.totalorder %s34, 0
        %s380 = scalar_select %p379, %s34, 0
        %s381 = smul.addr %s378, 4
        %s382 = sadd.s32 %s380, %s381
        %s383 = smul.addr %s382, 8
        %s384 = scalar_lea.vmem %s0, %s383
        %p385 = pneg %p64
        %p386 = pneg %p61
        %p387 = scmp.lt.s32.totalorder %s33, 1
        %s388 = scalar_select %p387, %s33, 1
        %p389 = scmp.lt.s32.totalorder %s34, 0
        %s390 = scalar_select %p389, %s34, 0
        %s391 = sadd.s32 %s390, %s388
        %s392 = smul.addr %s391, 8
        %s393 = scalar_lea.vmem %s1, %s392
        %p394 = pneg %p92
        %p395 = pneg %p89
        %p396 = pneg %p113
        %p397 = pneg %p110
        %p398 = pneg %p134
        %p399 = pneg %p131
        %p400 = pneg %p155
        %p401 = pneg %p152
        %p402 = pneg %p176
        %p403 = pneg %p173
        %p404 = pneg %p197
        %p405 = pneg %p194
        %p406 = pneg %p218
        %p407 = pneg %p215
        %p408 = pneg %p239
        %p409 = pneg %p236
        %p410 = pneg %p267
        %p411 = pneg %p264
        %s412 = sand.u32 %s254, 1
        %s413 = scalar_lea.sflag [#allocation4], %s412
        %s414 = sand.u32 %s254, 1
        %s415 = smul.addr %s414, 16
        %s416 = scalar_lea.vmem [#allocation5], %s415
        %p417 = pneg %p295
        %p418 = pneg %p292
        %s419 = sand.u32 %s282, 1
        %s420 = scalar_lea.sflag [#allocation7], %s419
        %s421 = sand.u32 %s282, 1
        %s422 = smul.addr %s421, 16
        %s423 = scalar_lea.vmem [#allocation6], %s422
        %p424 = scmp.lt.s32.totalorder %s33, 1
        %s425 = scalar_select %p424, %s33, 1
        %p426 = scmp.lt.s32.totalorder %s34, 0
        %s427 = scalar_select %p426, %s34, 0
        %s428 = smul.addr %s425, 4
        %s429 = sadd.s32 %s427, %s428
        %s430 = smul.addr %s429, 8
        %s431 = scalar_lea.vmem %s0, %s430
        %p432 = scmp.lt.s32.totalorder %s33, 1
        %s433 = scalar_select %p432, %s33, 1
        %p434 = scmp.lt.s32.totalorder %s34, 0
        %s435 = scalar_select %p434, %s34, 0
        %s436 = sadd.s32 %s435, %s433
        %s437 = smul.addr %s436, 8
        %s438 = scalar_lea.vmem %s1, %s437
        %v439 = vld [vmem:[#allocation2] sm:$0xff]
        %v440 = vld [vmem:[#allocation2 + $0x8] sm:$0xff]
        %v441 = vld [vmem:[%s431] sm:$0xff]
        %v442 = vld [vmem:[%s431 + $0x8] sm:$0xff]
        %v443 = vld [vmem:[%s431 + $0x10] sm:$0xff]
        %v444 = vld [vmem:[%s431 + $0x18] sm:$0xff]
        %vm445 = vcmask 261120
        %v447 = vsel %vm445, %v439, 0
        %v450 = vsel %vm445, %v440, 0
        %452 = vmatprep.subr.mxu0 0.0
        %453 = vmatpush1.msra.mxu0 0.0
        %454 = vmatprep.subr.mxu0 0.0
        %455 = vmatpush1.msra.mxu0 0.0
        %456 = vmatprep.subr.mxu0 0.0
        %457 = vmatpush1.msra.mxu0 0.0
        %458 = vmatprep.subr.mxu0 0.0
        %459 = vmatpush1.msra.mxu0 0.0
        %460 = vmatprep.subr.mxu0 0.0
        %461 = vmatpush1.msra.mxu0 0.0
        %462 = vmatprep.subr.mxu0 0.0
        %463 = vmatpush1.msra.mxu0 0.0
        %464 = vmatprep.subr.mxu0 0.0
        %465 = vmatpush1.msra.mxu0 0.0
        %466 = vmatprep.subr.mxu0 0.0
        %467 = vmatpush1.msra.mxu0 0.0
        %468 = vmatprep.subr.mxu0 0.0
        %469 = vmatpush1.msra.mxu0 0.0
        %470 = vmatprep.subr.mxu0 0.0
        %471 = vmatpush1.msra.mxu0 0.0
        %472 = vmatprep.subr.mxu0 0.0
        %473 = vmatpush1.msra.mxu0 0.0
        %474 = vmatprep.subr.mxu0 0.0
        %475 = vmatpush1.msra.mxu0 0.0
        %476 = vmatprep.subr.mxu0 0.0
        %477 = vmatpush1.msra.mxu0 %v444
        %478 = vmatprep.subr.mxu0 0.0
        %479 = vmatpush1.msra.mxu0 %v443
        %480 = vmatprep.subr.mxu0 0.0
        %481 = vmatpush1.msra.mxu0 %v442
        %482 = vmatprep.subr.mxu0 0.0
        %483 = vmatpush1.msra.mxu0 %v441
        %484 = vmatprep.subr.mxu0 0.0
        %485 = vmatpush2.msra.mxu0 0.0
        %486 = vmatprep.subr.mxu0 0.0
        %487 = vmatpush2.msra.mxu0 0.0
        %488 = vmatprep.subr.mxu0 0.0
        %489 = vmatpush2.msra.mxu0 0.0
        %490 = vmatprep.subr.mxu0 0.0
        %491 = vmatpush2.msra.mxu0 0.0
        %492 = vmatprep.subr.mxu0 0.0
        %493 = vmatpush2.msra.mxu0 0.0
        %494 = vmatprep.subr.mxu0 0.0
        %495 = vmatpush2.msra.mxu0 0.0
        %496 = vmatprep.subr.mxu0 0.0
        %497 = vmatpush2.msra.mxu0 0.0
        %498 = vmatprep.subr.mxu0 0.0
        %499 = vmatpush2.msra.mxu0 0.0
        %500 = vmatprep.subr.mxu0 0.0
        %501 = vmatpush2.msra.mxu0 0.0
        %502 = vmatprep.subr.mxu0 0.0
        %503 = vmatpush2.msra.mxu0 0.0
        %504 = vmatprep.subr.mxu0 0.0
        %505 = vmatpush2.msra.mxu0 0.0
        %506 = vmatprep.subr.mxu0 0.0
        %507 = vmatpush2.msra.mxu0 0.0
        %508 = vmatprep.subr.mxu0 0.0
        %509 = vmatpush2.msra.mxu0 0.0
        %510 = vmatprep.subr.mxu0 0.0
        %511 = vmatpush2.msra.mxu0 0.0
        %512 = vmatprep.subr.mxu0 0.0
        %513 = vmatpush2.msra.mxu0 0.0
        %514 = vmatprep.subr.mxu0 0.0
        %515 = vmatpush2.msra.mxu0 0.0
        %516 = vmatprep.mubr.f32.mxu0 0.0
        %517 = vmatmul.mubr.f32.gmra.mxu0 %v447
        %v518 = vpop.f32.mrf.mxu0
        %v519 = vadd.f32 0.0, %v518
        %v520 = vpop.f32.mrf.mxu0
        %521 = vmatprep.mubr.f32.mxu0 0.0
        %522 = vmatmul.mubr.f32.gmra.mxu0 %v450
        %v523 = vpop.f32.mrf.mxu0
        %v524 = vadd.f32 0.0, %v523
        %v525 = vpop.f32.mrf.mxu0
        %526 = vdwg.mxu0
        %v527 = vld [vmem:[%s3] sm:$0xff]
        %v528 = vld [vmem:[%s3 + $0x8] sm:$0xff]
        %530 = vset.pattern.permute.xlu0 0
        %531 = vperm.xlu0 %530, %v527
        %v532 = vpop.permute.xlu0 %531
        %535 = vset.pattern.permute.xlu0 0
        %536 = vperm.xlu0 %535, %v528
        %v537 = vpop.permute.xlu0 %536
        %v539 = vmul.f32 %v519, %v532
        %v540 = vmul.f32 %v524, %v537
        %v541 = vld [vmem:[%s4] sm:$0xff]
        %v542 = vld [vmem:[%s4 + $0x8] sm:$0xff]
        %544 = vset.pattern.permute.xlu0 0
        %545 = vperm.xlu0 %544, %v541
        %v546 = vpop.permute.xlu0 %545
        %549 = vset.pattern.permute.xlu0 0
        %550 = vperm.xlu0 %549, %v542
        %v551 = vpop.permute.xlu0 %550
        %v553 = vadd.f32 %v539, %v546
        %v554 = vadd.f32 %v540, %v551
        %v555 = vmax.f32 %v553, 0.0
        %v556 = vmax.f32 %v554, 0.0
        %557 = vst [vmem:[%s416] sm:$0xff] %v555
        %558 = vst [vmem:[%s416 + $0x8] sm:$0xff] %v556
        %v559 = vld [vmem:[%s5] sm:$0xff]
        %v560 = vld [vmem:[%s5 + $0x8] sm:$0xff]
        %v561 = vld [vmem:[%s438] sm:$0xff]
        %v562 = vld [vmem:[%s6] sm:$0xff]
        %v563 = vld [vmem:[%s6 + $0x8] sm:$0xff]
        %vm564 = vcmask 130048
        %v566 = vsel %vm564, %v562, 0
        %v569 = vsel %vm564, %v563, 0
        %571 = vmatprep.subr.mxu0 0.0
        %572 = vmatpush1.msra.mxu0 0.0
        %573 = vmatprep.subr.mxu0 0.0
        %574 = vmatpush1.msra.mxu0 0.0
        %575 = vmatprep.subr.mxu0 0.0
        %576 = vmatpush1.msra.mxu0 0.0
        %577 = vmatprep.subr.mxu0 0.0
        %578 = vmatpush1.msra.mxu0 0.0
        %579 = vmatprep.subr.mxu0 0.0
        %580 = vmatpush1.msra.mxu0 0.0
        %581 = vmatprep.subr.mxu0 0.0
        %582 = vmatpush1.msra.mxu0 0.0
        %583 = vmatprep.subr.mxu0 0.0
        %584 = vmatpush1.msra.mxu0 0.0
        %585 = vmatprep.subr.mxu0 0.0
        %586 = vmatpush1.msra.mxu0 0.0
        %587 = vmatprep.subr.mxu0 0.0
        %588 = vmatpush1.msra.mxu0 0.0
        %589 = vmatprep.subr.mxu0 0.0
        %590 = vmatpush1.msra.mxu0 0.0
        %591 = vmatprep.subr.mxu0 0.0
        %592 = vmatpush1.msra.mxu0 0.0
        %593 = vmatprep.subr.mxu0 0.0
        %594 = vmatpush1.msra.mxu0 0.0
        %595 = vmatprep.subr.mxu0 0.0
        %596 = vmatpush1.msra.mxu0 0.0
        %597 = vmatprep.subr.mxu0 0.0
        %598 = vmatpush1.msra.mxu0 0.0
        %599 = vmatprep.subr.mxu0 0.0
        %600 = vmatpush1.msra.mxu0 %v556
        %601 = vmatprep.subr.mxu0 0.0
        %602 = vmatpush1.msra.mxu0 %v555
        %603 = vmatprep.subr.mxu0 0.0
        %604 = vmatpush2.msra.mxu0 0.0
        %605 = vmatprep.subr.mxu0 0.0
        %606 = vmatpush2.msra.mxu0 0.0
        %607 = vmatprep.subr.mxu0 0.0
        %608 = vmatpush2.msra.mxu0 0.0
        %609 = vmatprep.subr.mxu0 0.0
        %610 = vmatpush2.msra.mxu0 0.0
        %611 = vmatprep.subr.mxu0 0.0
        %612 = vmatpush2.msra.mxu0 0.0
        %613 = vmatprep.subr.mxu0 0.0
        %614 = vmatpush2.msra.mxu0 0.0
        %615 = vmatprep.subr.mxu0 0.0
        %616 = vmatpush2.msra.mxu0 0.0
        %617 = vmatprep.subr.mxu0 0.0
        %618 = vmatpush2.msra.mxu0 0.0
        %619 = vmatprep.subr.mxu0 0.0
        %620 = vmatpush2.msra.mxu0 0.0
        %621 = vmatprep.subr.mxu0 0.0
        %622 = vmatpush2.msra.mxu0 0.0
        %623 = vmatprep.subr.mxu0 0.0
        %624 = vmatpush2.msra.mxu0 0.0
        %625 = vmatprep.subr.mxu0 0.0
        %626 = vmatpush2.msra.mxu0 0.0
        %627 = vmatprep.subr.mxu0 0.0
        %628 = vmatpush2.msra.mxu0 0.0
        %629 = vmatprep.subr.mxu0 0.0
        %630 = vmatpush2.msra.mxu0 0.0
        %631 = vmatprep.subr.mxu0 0.0
        %632 = vmatpush2.msra.mxu0 0.0
        %633 = vmatprep.subr.mxu0 0.0
        %634 = vmatpush2.msra.mxu0 0.0
        %635 = vmatprep.mubr.f32.mxu0 0.0
        %636 = vmatmul.mubr.f32.gmra.mxu0 %v566
        %v637 = vpop.f32.mrf.mxu0
        %v638 = vadd.f32 0.0, %v637
        %v639 = vpop.f32.mrf.mxu0
        %640 = vmatprep.mubr.f32.mxu0 0.0
        %641 = vmatmul.mubr.f32.gmra.mxu0 %v569
        %v642 = vpop.f32.mrf.mxu0
        %v643 = vadd.f32 0.0, %v642
        %v644 = vpop.f32.mrf.mxu0
        %645 = vdwg.mxu0
        %vm646 = vcmask 64512
        %v648 = vsel %vm646, %v559, 0
        %v651 = vsel %vm646, %v560, 0
        %653 = vmatprep.subr.mxu0 0.0
        %654 = vmatpush1.msra.mxu0 0.0
        %655 = vmatprep.subr.mxu0 0.0
        %656 = vmatpush1.msra.mxu0 0.0
        %657 = vmatprep.subr.mxu0 0.0
        %658 = vmatpush1.msra.mxu0 0.0
        %659 = vmatprep.subr.mxu0 0.0
        %660 = vmatpush1.msra.mxu0 0.0
        %661 = vmatprep.subr.mxu0 0.0
        %662 = vmatpush1.msra.mxu0 0.0
        %663 = vmatprep.subr.mxu0 0.0
        %664 = vmatpush1.msra.mxu0 0.0
        %665 = vmatprep.subr.mxu0 0.0
        %666 = vmatpush1.msra.mxu0 0.0
        %667 = vmatprep.subr.mxu0 0.0
        %668 = vmatpush1.msra.mxu0 0.0
        %669 = vmatprep.subr.mxu0 0.0
        %670 = vmatpush1.msra.mxu0 0.0
        %671 = vmatprep.subr.mxu0 0.0
        %672 = vmatpush1.msra.mxu0 0.0
        %673 = vmatprep.subr.mxu0 0.0
        %674 = vmatpush1.msra.mxu0 0.0
        %675 = vmatprep.subr.mxu0 0.0
        %676 = vmatpush1.msra.mxu0 0.0
        %677 = vmatprep.subr.mxu0 0.0
        %678 = vmatpush1.msra.mxu0 0.0
        %679 = vmatprep.subr.mxu0 0.0
        %680 = vmatpush1.msra.mxu0 0.0
        %681 = vmatprep.subr.mxu0 0.0
        %682 = vmatpush1.msra.mxu0 0.0
        %683 = vmatprep.subr.mxu0 0.0
        %684 = vmatpush1.msra.mxu0 %v561
        %685 = vmatprep.subr.mxu0 0.0
        %686 = vmatpush2.msra.mxu0 0.0
        %687 = vmatprep.subr.mxu0 0.0
        %688 = vmatpush2.msra.mxu0 0.0
        %689 = vmatprep.subr.mxu0 0.0
        %690 = vmatpush2.msra.mxu0 0.0
        %691 = vmatprep.subr.mxu0 0.0
        %692 = vmatpush2.msra.mxu0 0.0
        %693 = vmatprep.subr.mxu0 0.0
        %694 = vmatpush2.msra.mxu0 0.0
        %695 = vmatprep.subr.mxu0 0.0
        %696 = vmatpush2.msra.mxu0 0.0
        %697 = vmatprep.subr.mxu0 0.0
        %698 = vmatpush2.msra.mxu0 0.0
        %699 = vmatprep.subr.mxu0 0.0
        %700 = vmatpush2.msra.mxu0 0.0
        %701 = vmatprep.subr.mxu0 0.0
        %702 = vmatpush2.msra.mxu0 0.0
        %703 = vmatprep.subr.mxu0 0.0
        %704 = vmatpush2.msra.mxu0 0.0
        %705 = vmatprep.subr.mxu0 0.0
        %706 = vmatpush2.msra.mxu0 0.0
        %707 = vmatprep.subr.mxu0 0.0
        %708 = vmatpush2.msra.mxu0 0.0
        %709 = vmatprep.subr.mxu0 0.0
        %710 = vmatpush2.msra.mxu0 0.0
        %711 = vmatprep.subr.mxu0 0.0
        %712 = vmatpush2.msra.mxu0 0.0
        %713 = vmatprep.subr.mxu0 0.0
        %714 = vmatpush2.msra.mxu0 0.0
        %715 = vmatprep.subr.mxu0 0.0
        %716 = vmatpush2.msra.mxu0 0.0
        %717 = vmatprep.mubr.f32.mxu0 0.0
        %718 = vmatmul.mubr.f32.gmra.mxu0 %v648
        %v719 = vpop.f32.mrf.mxu0
        %v720 = vadd.f32 %v638, %v719
        %v721 = vpop.f32.mrf.mxu0
        %722 = vmatprep.mubr.f32.mxu0 0.0
        %723 = vmatmul.mubr.f32.gmra.mxu0 %v651
        %v724 = vpop.f32.mrf.mxu0
        %v725 = vadd.f32 %v643, %v724
        %v726 = vpop.f32.mrf.mxu0
        %727 = vdwg.mxu0
        %v728 = vld [vmem:[%s7] sm:$0xff]
        %v729 = vld [vmem:[%s7 + $0x8] sm:$0xff]
        %731 = vset.pattern.permute.xlu0 0
        %732 = vperm.xlu0 %731, %v728
        %v733 = vpop.permute.xlu0 %732
        %736 = vset.pattern.permute.xlu0 0
        %737 = vperm.xlu0 %736, %v729
        %v738 = vpop.permute.xlu0 %737
        %v740 = vmul.f32 %v720, %v733
        %v741 = vmul.f32 %v725, %v738
        %v742 = vld [vmem:[%s8] sm:$0xff]
        %v743 = vld [vmem:[%s8 + $0x8] sm:$0xff]
        %745 = vset.pattern.permute.xlu0 0
        %746 = vperm.xlu0 %745, %v742
        %v747 = vpop.permute.xlu0 %746
        %750 = vset.pattern.permute.xlu0 0
        %751 = vperm.xlu0 %750, %v743
        %v752 = vpop.permute.xlu0 %751
        %v754 = vadd.f32 %v740, %v747
        %v755 = vadd.f32 %v741, %v752
        %v756 = vmax.f32 %v754, 0.0
        %v757 = vmax.f32 %v755, 0.0
        %758 = vst [vmem:[%s423] sm:$0xff] %v756
        %759 = vst [vmem:[%s423 + $0x8] sm:$0xff] %v757
        %s760 = sand.u32 %s254, 1
        %s761 = scalar_lea.sflag [#allocation4], %s760
        %s762 = sand.u32 %s254, 1
        %s763 = smul.addr %s762, 16
        %s764 = scalar_lea.vmem [#allocation5], %s763
        %s765 = sand.u32 %s282, 1
        %s766 = scalar_lea.sflag [#allocation7], %s765
        %s767 = sand.u32 %s282, 1
        %s768 = smul.addr %s767, 16
        %s769 = scalar_lea.vmem [#allocation6], %s768
        // Predicated region
        $region61: #{tpu_custom_call.1} parent=55 // pred_check
          %p770 = pneg %p264
        $region62: #{tpu_custom_call.1} parent=55 // pred_check_branch
          %772 = sbr.rel (%p770) target = $region64
        $region63: #{tpu_custom_call.1} parent=55 // pred_region
          %s774 = ssub.s32 256, 256
          %775 = vsyncadd %s761, %s774
          %s776 = smul.addr %s33, 2
          %s777 = sadd.s32 %s34, %s776
          %s778 = smul.addr %s777, 128
          %s779 = scalar_lea.hbm %s9, %s778
          %s780 = sshll.u32 %s764, 4
          %s781 = int_to_ptr.vmem [resolvable:$true] %s780
          %786 = dma.vmem_to_hbm [thread:$0]  %s781, 256, %s779, %s761, 128, 128, 8
        $region64: #{tpu_custom_call.1} parent=55 // pred_fallthru
          _
        // Predicated region
        $region65: #{tpu_custom_call.1} parent=55 // pred_check
          %p787 = pneg %p292
        $region66: #{tpu_custom_call.1} parent=55 // pred_check_branch
          %789 = sbr.rel (%p787) target = $region68
        $region67: #{tpu_custom_call.1} parent=55 // pred_region
          %s791 = ssub.s32 256, 256
          %792 = vsyncadd %s766, %s791
          %s793 = smul.addr %s33, 2
          %s794 = sadd.s32 %s34, %s793
          %s795 = smul.addr %s794, 128
          %s796 = scalar_lea.hbm %s10, %s795
          %s797 = sshll.u32 %s769, 4
          %s798 = int_to_ptr.vmem [resolvable:$true] %s797
          %803 = dma.vmem_to_hbm [thread:$0]  %s798, 256, %s796, %s766, 128, 128, 8
        $region68: #{tpu_custom_call.1} parent=55 // pred_fallthru
          _
      $region56: #{tpu_custom_call.1} parent=5 // pred_fallthru
        _
      %p804 = scmp.le.s32.totalorder 2, %s24
      // Predicated region
      $region69: #{tpu_custom_call.1} parent=5 // pred_check
        %p805 = pneg %p804
      $region70: #{tpu_custom_call.1} parent=5 // pred_check_branch
        %807 = sbr.rel (%p805) target = $region72
      $region71: #{tpu_custom_call.1} parent=5 // pred_region
        %s808 = ssub.s32 %s24, 2
        // Predicated region
        $region73: #{tpu_custom_call.1} parent=71 // pred_check
          %p809 = pneg %p270
        $region74: #{tpu_custom_call.1} parent=71 // pred_check_branch
          %811 = sbr.rel (%p809) target = $region76
        $region75: #{tpu_custom_call.1} parent=71 // pred_region
          %s812 = sand.u32 %s255, 1
          %s813 = scalar_lea.sflag [#allocation4], %s812
          %s814 = sand.u32 %s255, 1
          %s815 = smul.addr %s814, 16
          %s816 = scalar_lea.vmem [#allocation5], %s815
          %817 = dma.done %s813, 256
        $region76: #{tpu_custom_call.1} parent=71 // pred_fallthru
          _
        // Predicated region
        $region77: #{tpu_custom_call.1} parent=71 // pred_check
          %p818 = pneg %p298
        $region78: #{tpu_custom_call.1} parent=71 // pred_check_branch
          %820 = sbr.rel (%p818) target = $region80
        $region79: #{tpu_custom_call.1} parent=71 // pred_region
          %s821 = sand.u32 %s283, 1
          %s822 = scalar_lea.sflag [#allocation7], %s821
          %s823 = sand.u32 %s283, 1
          %s824 = smul.addr %s823, 16
          %s825 = scalar_lea.vmem [#allocation6], %s824
          %826 = dma.done %s822, 256
        $region80: #{tpu_custom_call.1} parent=71 // pred_fallthru
          _
      $region72: #{tpu_custom_call.1} parent=5 // pred_fallthru
        _
    $region6: #{tpu_custom_call.1} parent=1 // loop_footer
      %s28 = sadd.s32 1, %s24
    $region7: #{tpu_custom_call.1} parent=1 // loop_footer_branch
      %23 = sbr.rel target = $region3
    $region8: #{tpu_custom_call.1} parent=1 // loop_exit
      _
    %827 = vsyncpa [#allocation3], 1
    %s828 = scalar_lea.sflag [#allocation3], 1
    %829 = vsyncpa %s828, 1
    %830 = vsyncpa [#allocation4], 1
    %s831 = scalar_lea.sflag [#allocation4], 1
    %832 = vsyncpa %s831, 1
    %833 = vsyncpa [#allocation7], 1
    %s834 = scalar_lea.sflag [#allocation7], 1
    %835 = vsyncpa %s834, 1

</llo_original>
